<compile_context>
chip_gen: v7x
topology: tpu7x:2x2x1
jax: 0.10.0
libtpu: 0.0.40
codegen_flags: <defaults>
</compile_context>

<pallas_src>
import jax
import jax.numpy as jnp
from jax import lax
from jax.experimental import pallas as pl
from jax.experimental.pallas import tpu as pltpu


def _interp_matrix(s_in: int, s_out: int) -> jnp.ndarray:
    """(S_in, S_out) matrix M s.t. out[:, t] = sum_s M[s, t] * in[:, s].

    Matches F.interpolate(mode='linear', align_corners=False):
      src = (t + 0.5) * (S_in / S_out) - 0.5, clamped at 0; linear blend of
      floor(src) and floor(src)+1 (clamped to S_in - 1).  Columns sum to 1.
    """
    j = jnp.arange(s_out, dtype=jnp.float32)
    scale = s_in / s_out
    src = jnp.maximum((j + 0.5) * scale - 0.5, 0.0)
    idx0 = jnp.clip(jnp.floor(src).astype(jnp.int32), 0, s_in - 1)
    idx1 = jnp.minimum(idx0 + 1, s_in - 1)
    lam1 = src - idx0.astype(jnp.float32)
    lam0 = 1.0 - lam1
    cols = jnp.arange(s_out)
    m = jnp.zeros((s_in, s_out), jnp.float32)
    m = m.at[idx0, cols].add(lam0)
    m = m.at[idx1, cols].add(lam1)
    return m


def _build_alignment_matrix(emb_table, conv_w, S: int, T: int) -> jnp.ndarray:
    """Fold embedding @ conv(k=3,pad=1) @ interp into one (S*V, O*T) matrix K.

    a[b, o, t] = sum_{m, v} onehot[b, m*V+v] * K[m*V+v, o*T+t]   (+ conv bias).
    """
    O = conv_w.shape[0]
    mt = _interp_matrix(S, T)                                    # (S, T)
    zrow = jnp.zeros((1, T), mt.dtype)
    # Shift-folded interpolation per conv tap k (tap k pairs with x[s + k - 1]):
    #   mk[k, m, t] = mt[m + 1 - k, t]  where in range, else 0.
    mk = jnp.stack(
        [jnp.concatenate([mt[1:], zrow], axis=0),                # k = 0  (x[s-1])
         mt,                                                     # k = 1  (x[s])
         jnp.concatenate([zrow, mt[:-1]], axis=0)],              # k = 2  (x[s+1])
        axis=0)                                                  # (3, S, T)
    # g[k, v, o] = Emb[v, :] . W[o, :, k]
    g = jnp.einsum('ve,oek->kvo', emb_table.astype(jnp.float32),
                   conv_w.astype(jnp.float32))                   # (3, V, O)
    k = jnp.einsum('kvo,kmt->mvot', g, mk)                       # (S, V, O, T)
    return k.reshape(S * emb_table.shape[0], O * T)              # (S*V, O*T)


def _sdit_alignment_kernel(ids_ref, vpat_ref, k_ref, bias_ref, z_ref, o_ref):
    # ids_ref : (Bb, 1, S*V) int32  token id repeated V times per position (col m*V+v -> ids[m])
    # vpat_ref: (1, S*V)     int32  vocab-index pattern (col m*V+v -> v)
    # k_ref   : (S*V, O*T)   bf16   folded embedding+conv+interp linear map
    # bias_ref: (1, O*T)     f32    conv bias broadcast over time
    # z_ref   : (Bb, 1, C*T)        flattened latent passthrough
    # o_ref   : (Bb, 1, (C+O)*T)    flattened output (z || alignment)
    ct = z_ref.shape[2]

    # One-hot tokens (exact in bf16): (Bb, S*V)
    onehot = (ids_ref[:, 0, :] == vpat_ref[...]).astype(jnp.bfloat16)

    # Entire embedding -> conv -> interpolation chain as a single MXU matmul.
    a = jnp.dot(onehot, k_ref[...], preferred_element_type=jnp.float32)   # (Bb, O*T) f32
    a = a + bias_ref[...]

    # Lane-dense concat: columns [0, C*T) <- z, columns [C*T, (C+O)*T) <- alignment.
    o_ref[:, 0, :ct] = z_ref[:, 0, :].astype(o_ref.dtype)
    o_ref[:, 0, ct:] = a.astype(o_ref.dtype)


def sdit_alignment_forward(z, token_ids, emb_table, conv_w, conv_b, *, batch_blocks: int = 1):
    """Fused SDiTAlignment.forward(z, token_ids).

    Args:
      z:         (B, C, T) latent representation.
      token_ids: (B, S)    int token ids.
      emb_table: (V, E)    embedding weight.
      conv_w:    (O, E, 3) Conv1d weight (out, in, kernel).
      conv_b:    (O,)      Conv1d bias.
      batch_blocks: number of grid steps over the batch.  Default 1 (fully collapsed,
        best on single-TC v5e/v6e); use 2 on v7x with larger batches so both
        TensorCores get work (the axis is marked "parallel").
    Returns:
      (B, C + O, T) array: concat([z, downsampled alignment], channel axis).
    """
    B, C, T = z.shape
    _, S = token_ids.shape
    V, E = emb_table.shape
    O = conv_w.shape[0]
    assert B % batch_blocks == 0, "batch_blocks must divide the batch size"
    bb = B // batch_blocks

    # One-time weight folding (in a real module this would be cached at init):
    k_mat = _build_alignment_matrix(emb_table, conv_w, S, T).astype(jnp.bfloat16)   # (S*V, O*T)
    bias = jnp.broadcast_to(conv_b.astype(jnp.float32)[:, None], (O, T)).reshape(1, O * T)
    vpat = jnp.tile(jnp.arange(V, dtype=jnp.int32), S).reshape(1, S * V)
    ids_rep = jnp.repeat(token_ids.astype(jnp.int32), V, axis=1).reshape(B, 1, S * V)
    z_flat = z.reshape(B, 1, C * T)

    out_flat = pl.pallas_call(
        _sdit_alignment_kernel,
        out_shape=jax.ShapeDtypeStruct((B, 1, (C + O) * T), z.dtype),
        grid=(batch_blocks,),
        in_specs=[
            pl.BlockSpec((bb, 1, S * V), lambda i: (i, 0, 0)),     # repeated token ids
            pl.BlockSpec((1, S * V), lambda i: (0, 0)),            # vocab-index pattern (resident)
            pl.BlockSpec((S * V, O * T), lambda i: (0, 0)),        # folded K matrix (resident)
            pl.BlockSpec((1, O * T), lambda i: (0, 0)),            # bias (resident)
            pl.BlockSpec((bb, 1, C * T), lambda i: (i, 0, 0)),     # flattened z
        ],
        out_specs=pl.BlockSpec((bb, 1, (C + O) * T), lambda i: (i, 0, 0)),
        compiler_params=pltpu.CompilerParams(
            dimension_semantics=("parallel",),                     # shards across TCs if >1 block
        ),
    )(ids_rep, vpat, k_mat, bias, z_flat)

    return out_flat.reshape(B, C + O, T)


if __name__ == "__main__":
    key = jax.random.PRNGKey(0)
    kz, kt, ke, kw, kb = jax.random.split(key, 5)

    # Small shapes consistent with the module.
    B = 2                   # batch
    vocab_size = 32         # V
    embedding_dim = 32      # E
    alignment_out_dim = 16  # O
    latent_channels = 8     # C
    seq_length = 16         # S (sparse alignment length)
    target_length = 32      # T (latent time length)

    z = jax.random.normal(kz, (B, latent_channels, target_length), jnp.float32)
    token_ids = jax.random.randint(kt, (B, seq_length), 0, vocab_size, dtype=jnp.int32)

    emb_table = jax.random.normal(ke, (vocab_size, embedding_dim), jnp.float32)
    bound = 1.0 / ((embedding_dim * 3) ** 0.5)   # PyTorch Conv1d default init bound
    conv_w = jax.random.uniform(kw, (alignment_out_dim, embedding_dim, 3),
                                jnp.float32, -bound, bound)
    conv_b = jax.random.uniform(kb, (alignment_out_dim,), jnp.float32, -bound, bound)

    out = jax.jit(sdit_alignment_forward)(z, token_ids, emb_table, conv_w, conv_b)
    jax.block_until_ready(out)

    # ---- independent JAX reference (f32, PyTorch semantics) -------------------
    x = emb_table[token_ids]                         # (B, S, E) gather
    xc = jnp.swapaxes(x, 1, 2)                       # (B, E, S)
    y = lax.conv_general_dilated(
        xc, conv_w, window_strides=(1,), padding=((1, 1),),
        dimension_numbers=("NCH", "OIH", "NCH"))     # (B, O, S)
    y = y + conv_b[None, :, None]
    mt = _interp_matrix(seq_length, target_length)
    a_ref = jnp.einsum("bos,st->bot", y, mt)         # (B, O, T)
    ref = jnp.concatenate([z, a_ref], axis=1)

    assert out.shape == (B, latent_channels + alignment_out_dim, target_length)
    assert jnp.allclose(out, ref, atol=1e-2, rtol=1e-2), float(jnp.max(jnp.abs(out - ref)))

    print("KERNEL_OK")
</pallas_src>

<mosaic_0001>
module attributes {stable_mosaic.version = 11 : i64} {
  func.func private @main(%arg0: i32) attributes {dimension_semantics = [#tpu.dimension_semantics<core_parallel>], iteration_bounds = array<i64: 2>, tpu.core_type = #tpu.core_type<sc_scalar_subcore>, window_params = []} {
    return
  }
}

module attributes {stable_mosaic.version = 11 : i64} {
  func.func private @main(%arg0: i32) attributes {dimension_semantics = [#tpu.dimension_semantics<core_parallel>], iteration_bounds = array<i64: 2>, tpu.core_type = #tpu.core_type<sc_scalar_subcore>, window_params = []} {
    return
  }
}

module attributes {stable_mosaic.version = 11 : i64} {
  func.func @_sdit_alignment_kernel(%arg0: i32, %arg1: memref<2x1x512xi32, #tpu.memory_space<vmem>>, %arg2: memref<1x512xi32, #tpu.memory_space<vmem>>, %arg3: memref<512x512xbf16, #tpu.memory_space<vmem>>, %arg4: memref<1x512xf32, #tpu.memory_space<vmem>>, %arg5: memref<2x1x256xf32, #tpu.memory_space<vmem>>, %arg6: memref<2x1x768xf32, #tpu.memory_space<vmem>>) attributes {dimension_semantics = [#tpu.dimension_semantics<parallel>], iteration_bounds = array<i64: 1>, scalar_prefetch = 0 : i64, scratch_operands = 0 : i64, tpu.core_type = #tpu.core_type<tc>, window_params = [{transform_indices = @transform_0, window_bounds = array<i64: 2, 1, 512>}, {pipeline_mode = #tpu.pipeline_mode<synchronous>, transform_indices = @transform_1, window_bounds = array<i64: 1, 512>}, {pipeline_mode = #tpu.pipeline_mode<synchronous>, transform_indices = @transform_2, window_bounds = array<i64: 512, 512>}, {pipeline_mode = #tpu.pipeline_mode<synchronous>, transform_indices = @transform_3, window_bounds = array<i64: 1, 512>}, {transform_indices = @transform_4, window_bounds = array<i64: 2, 1, 256>}, {transform_indices = @transform_5, window_bounds = array<i64: 2, 1, 768>}]} {
    %c0 = arith.constant 0 : index
    %c0_0 = arith.constant 0 : index
    %c0_1 = arith.constant 0 : index
    %0 = vector.load %arg1[%c0, %c0_0, %c0_1] : memref<2x1x512xi32, #tpu.memory_space<vmem>>, vector<2x1x512xi32>
    %1 = vector.shape_cast %0 : vector<2x1x512xi32> to vector<2x512xi32>
    %c0_2 = arith.constant 0 : index
    %c0_3 = arith.constant 0 : index
    %2 = vector.load %arg2[%c0_2, %c0_3] : memref<1x512xi32, #tpu.memory_space<vmem>>, vector<1x512xi32>
    %3 = vector.broadcast %2 : vector<1x512xi32> to vector<2x512xi32>
    %4 = arith.cmpi eq, %1, %3 : vector<2x512xi32>
    %5 = arith.extui %4 : vector<2x512xi1> to vector<2x512xi32>
    %6 = arith.sitofp %5 : vector<2x512xi32> to vector<2x512xf32>
    %7 = arith.truncf %6 : vector<2x512xf32> to vector<2x512xbf16>
    %c0_4 = arith.constant 0 : index
    %c0_5 = arith.constant 0 : index
    %8 = vector.load %arg3[%c0_4, %c0_5] : memref<512x512xbf16, #tpu.memory_space<vmem>>, vector<512x512xbf16>
    %cst = arith.constant dense<0.000000e+00> : vector<2x512xf32>
    %9 = tpu.matmul %7, %8, %cst {dimension_numbers = #tpu.dot_dimension_numbers<[1], [0], [0], [1], [0, 0, 1, 1], [], []>} : vector<2x512xbf16>, vector<512x512xbf16>, vector<2x512xf32> -> vector<2x512xf32>
    %c0_6 = arith.constant 0 : index
    %c0_7 = arith.constant 0 : index
    %10 = vector.load %arg4[%c0_6, %c0_7] : memref<1x512xf32, #tpu.memory_space<vmem>>, vector<1x512xf32>
    %11 = vector.broadcast %10 : vector<1x512xf32> to vector<2x512xf32>
    %12 = arith.addf %9, %11 : vector<2x512xf32>
    %c0_8 = arith.constant 0 : index
    %c0_9 = arith.constant 0 : index
    %c0_10 = arith.constant 0 : index
    %13 = vector.load %arg5[%c0_8, %c0_9, %c0_10] : memref<2x1x256xf32, #tpu.memory_space<vmem>>, vector<2x1x256xf32>
    %14 = vector.shape_cast %13 : vector<2x1x256xf32> to vector<2x256xf32>
    %c0_11 = arith.constant 0 : index
    %c0_12 = arith.constant 0 : index
    %c0_13 = arith.constant 0 : index
    %15 = vector.load %arg6[%c0_11, %c0_12, %c0_13] : memref<2x1x768xf32, #tpu.memory_space<vmem>>, vector<2x1x256xf32>
    %16 = vector.shape_cast %15 : vector<2x1x256xf32> to vector<2x256xf32>
    %17 = vector.shape_cast %14 : vector<2x256xf32> to vector<2x1x256xf32>
    tpu.vector_store %arg6[%c0_11, %c0_12, %c0_13], %17 {strides = array<i32>} : memref<2x1x768xf32, #tpu.memory_space<vmem>>, vector<2x1x256xf32>,
    %c0_14 = arith.constant 0 : index
    %c0_15 = arith.constant 0 : index
    %c256 = arith.constant 256 : index
    %18 = vector.load %arg6[%c0_14, %c0_15, %c256] : memref<2x1x768xf32, #tpu.memory_space<vmem>>, vector<2x1x512xf32>
    %19 = vector.shape_cast %18 : vector<2x1x512xf32> to vector<2x512xf32>
    %20 = vector.shape_cast %12 : vector<2x512xf32> to vector<2x1x512xf32>
    tpu.vector_store %arg6[%c0_14, %c0_15, %c256], %20 {strides = array<i32>} : memref<2x1x768xf32, #tpu.memory_space<vmem>>, vector<2x1x512xf32>,
    return
  }
  func.func @transform_0(%arg0: i32) -> (i32, i32, i32) {
    %c0_i32 = arith.constant 0 : i32
    %c0_i32_0 = arith.constant 0 : i32
    %c0_i32_1 = arith.constant 0 : i32
    return %arg0, %c0_i32, %c0_i32_0 : i32, i32, i32
  }
  func.func @transform_1(%arg0: i32) -> (i32, i32) {
    %c0_i32 = arith.constant 0 : i32
    %c0_i32_0 = arith.constant 0 : i32
    %c0_i32_1 = arith.constant 0 : i32
    return %c0_i32, %c0_i32_0 : i32, i32
  }
  func.func @transform_2(%arg0: i32) -> (i32, i32) {
    %c0_i32 = arith.constant 0 : i32
    %c0_i32_0 = arith.constant 0 : i32
    %c0_i32_1 = arith.constant 0 : i32
    return %c0_i32, %c0_i32_0 : i32, i32
  }
  func.func @transform_3(%arg0: i32) -> (i32, i32) {
    %c0_i32 = arith.constant 0 : i32
    %c0_i32_0 = arith.constant 0 : i32
    %c0_i32_1 = arith.constant 0 : i32
    return %c0_i32, %c0_i32_0 : i32, i32
  }
  func.func @transform_4(%arg0: i32) -> (i32, i32, i32) {
    %c0_i32 = arith.constant 0 : i32
    %c0_i32_0 = arith.constant 0 : i32
    %c0_i32_1 = arith.constant 0 : i32
    return %arg0, %c0_i32, %c0_i32_0 : i32, i32, i32
  }
  func.func @transform_5(%arg0: i32) -> (i32, i32, i32) {
    %c0_i32 = arith.constant 0 : i32
    %c0_i32_0 = arith.constant 0 : i32
    %c0_i32_1 = arith.constant 0 : i32
    return %arg0, %c0_i32, %c0_i32_0 : i32, i32, i32
  }
}

</mosaic_0001>

<llo_original>
// kernel: tile.9
$region0: #{tile.9}
  %s0 = inlined_call_operand.vmem [shape: s32[16,32], index: 0, kind: input, shape index: {}]
  %s1 = inlined_call_operand.vmem [shape: s32[1,512], index: 1, kind: output, shape index: {}]
  $region1: #{tile.9} parent=0
    #allocation0 [shape = 'u8[16384]{0}', space=vmem, size = 0x4000, scoped, tag = 'scoped mem for output reshape']
    %v2 = vld [vmem:[%s0] ss:$4 sm:$0xf]
    %vm3 = vcmask 261120
    %4 = vst.msk [vmem:[#allocation0] ss:$8 sm:$0xf] %vm3, %v2
    %s5 = scalar_lea.vmem %s0, 3
    %v6 = vld [vmem:[%s5] ss:$4 sm:$0xf]
    %7 = vrot.lane.b32.xlu0 %v6, 96
    %v8 = vpop.permute.xlu0 %7
    %vm9 = vcmask 1048320
    %10 = vst.msk [vmem:[#allocation0] ss:$8 sm:$0xf] %vm9, %v8
    %s11 = scalar_lea.vmem %s0, 2
    %v12 = vld [vmem:[%s11] ss:$4 sm:$0xf]
    %13 = vrot.lane.b32.xlu0 %v12, 64
    %v14 = vpop.permute.xlu0 %13
    %vm15 = vcmask 785920
    %16 = vst.msk [vmem:[#allocation0] ss:$8 sm:$0xf] %vm15, %v14
    %s17 = scalar_lea.vmem %s0, 1
    %v18 = vld [vmem:[%s17] ss:$4 sm:$0xf]
    %19 = vrot.lane.b32.xlu0 %v18, 32
    %v20 = vpop.permute.xlu0 %19
    %vm21 = vcmask 523520
    %22 = vst.msk [vmem:[#allocation0] ss:$8 sm:$0xf] %vm21, %v20
    %s24 = sshllo.u32 0, 1
    %v26 = vld [vmem:[#allocation0] sm:%s24]
    %s27 = sshllo.u32 0, 1
    %28 = vst [vmem:[%s1] sm:%s27] %v26
    %s29 = scalar_lea.vmem [#allocation0], 8
    %v30 = vld [vmem:[%s29] sm:%s24]
    %s31 = sshllo.u32 0, 1
    %s32 = scalar_lea.vmem %s1, 1
    %33 = vst [vmem:[%s32] sm:%s31] %v30
    %s34 = scalar_lea.vmem [#allocation0], 16
    %v35 = vld [vmem:[%s34] sm:%s24]
    %s36 = sshllo.u32 0, 1
    %s37 = smul.addr 1, 2
    %s38 = scalar_lea.vmem %s1, %s37
    %39 = vst [vmem:[%s38] sm:%s36] %v35
    %s40 = scalar_lea.vmem [#allocation0], 24
    %v41 = vld [vmem:[%s40] sm:%s24]
    %s42 = sshllo.u32 0, 1
    %s43 = smul.addr 1, 3
    %s44 = scalar_lea.vmem %s1, %s43
    %45 = vst [vmem:[%s44] sm:%s42] %v41

// kernel: sdit_alignment_forward.1
$region0: #{sdit_alignment_forward.1}
  #allocation0 [shape = 'u32[]', space=smem, size = 0x4, offset = 0x4, fixed_abs, tag = 'smem constant byte address 0x4 - core index']
  #allocation1 [shape = 'u32[144,128]{1,0:T(1,128)}', space=vmem, size = 0x12000, scoped, tag = 'internal scratch']
  %s0 = inlined_call_operand.vmem [shape: s32[2,1,512], index: 0, kind: input, shape index: {}]
  %s1 = inlined_call_operand.vmem [shape: s32[1,512], index: 1, kind: input, shape index: {}]
  %s2 = inlined_call_operand.vmem [shape: bf16[512,512], index: 2, kind: input, shape index: {}]
  %s3 = inlined_call_operand.vmem [shape: f32[1,512], index: 3, kind: input, shape index: {}]
  %s4 = inlined_call_operand.vmem [shape: f32[2,1,256], index: 4, kind: input, shape index: {}]
  %s5 = inlined_call_operand.vmem [shape: f32[2,1,768], index: 5, kind: output, shape index: {}]
  %s6 = sld [smem:[#allocation0]]
  $region30: #{sdit_alignment_forward.1} parent=0
    _
  %s8 = ssub.s32 1, %s6
  %s9 = scalar_select 0, %s8, %s6
  // Predicated region
  $region2: #{sdit_alignment_forward.1} parent=0 // pred_check
    _
  $region3: #{sdit_alignment_forward.1} parent=0 // pred_check_branch
    %11 = sbr.rel (0) target = $region5
  $region4: #{sdit_alignment_forward.1} parent=0 // pred_region
    _
  $region5: #{sdit_alignment_forward.1} parent=0 // pred_fallthru
    _
  // Predicated region
  $region6: #{sdit_alignment_forward.1} parent=0 // pred_check
    _
  $region7: #{sdit_alignment_forward.1} parent=0 // pred_check_branch
    %13 = sbr.rel (0) target = $region9
  $region8: #{sdit_alignment_forward.1} parent=0 // pred_region
    _
  $region9: #{sdit_alignment_forward.1} parent=0 // pred_fallthru
    _
  // Predicated region
  $region10: #{sdit_alignment_forward.1} parent=0 // pred_check
    _
  $region11: #{sdit_alignment_forward.1} parent=0 // pred_check_branch
    %15 = sbr.rel (0) target = $region13
  $region12: #{sdit_alignment_forward.1} parent=0 // pred_region
    _
  $region13: #{sdit_alignment_forward.1} parent=0 // pred_fallthru
    _
  // Predicated region
  $region14: #{sdit_alignment_forward.1} parent=0 // pred_check
    _
  $region15: #{sdit_alignment_forward.1} parent=0 // pred_check_branch
    %17 = sbr.rel (0) target = $region17
  $region16: #{sdit_alignment_forward.1} parent=0 // pred_region
    _
  $region17: #{sdit_alignment_forward.1} parent=0 // pred_fallthru
    _
  // Predicated region
  $region18: #{sdit_alignment_forward.1} parent=0 // pred_check
    _
  $region19: #{sdit_alignment_forward.1} parent=0 // pred_check_branch
    %19 = sbr.rel (0) target = $region21
  $region20: #{sdit_alignment_forward.1} parent=0 // pred_region
    _
  $region21: #{sdit_alignment_forward.1} parent=0 // pred_fallthru
    _
  %v20 = vld [vmem:[%s0] sm:$0xf]
  %v21 = vld [vmem:[%s0 + $0x4] sm:$0xf]
  %v22 = vld [vmem:[%s1] sm:$0xf]
  %v23 = vlaneseq
  %v24 = vshrl.u32 %v23, 7
  %v25 = vsub.s32 0, %v24
  %v26 = vrot.slane %v22, %v25
  %v27 = vlaneseq
  %v28 = vshrl.u32 %v27, 7
  %v29 = vsub.s32 1, %v28
  %v30 = vrot.slane %v22, %v29
  %v31 = vlaneseq
  %v32 = vshrl.u32 %v31, 7
  %v33 = vsub.s32 2, %v32
  %v34 = vrot.slane %v22, %v33
  %v35 = vlaneseq
  %v36 = vshrl.u32 %v35, 7
  %v37 = vsub.s32 3, %v36
  %v38 = vrot.slane %v22, %v37
  %v39 = vcombine.low %v26, %v30
  %v40 = vcombine.low %v34, %v38
  %v42 = vunpack.c.l.s4 1966171168
  %v43 = vunpack.c.0.s8 %v42
  %v44 = vlaneseq
  %v45 = vshrl.u32 %v44, 7
  %v46 = vsub.s32 %v43, %v45
  %v47 = vrot.slane %v39, %v46
  %v49 = vunpack.c.l.s4 1966171168
  %v50 = vunpack.c.0.s8 %v49
  %v51 = vlaneseq
  %v52 = vshrl.u32 %v51, 7
  %v53 = vsub.s32 %v50, %v52
  %v54 = vrot.slane %v40, %v53
  %v55 = vcombine.low %v47, %v54
  %v56 = vcombine.high %v47, %v54
  %v58 = vunpack.c.l.s4 1966171168
  %v59 = vunpack.c.0.s8 %v58
  %v60 = vlaneseq
  %v61 = vshrl.u32 %v60, 7
  %v62 = vsub.s32 %v59, %v61
  %v63 = vrot.slane %v55, %v62
  %v65 = vunpack.c.l.s4 1966171168
  %v66 = vunpack.c.0.s8 %v65
  %v67 = vlaneseq
  %v68 = vshrl.u32 %v67, 7
  %v69 = vsub.s32 %v66, %v68
  %v70 = vrot.slane %v56, %v69
  %vm71 = vcmp.eq.s32.totalorder %v20, %v63
  %vm72 = vcmp.eq.s32.totalorder %v21, %v70
  %v73 = vsel %vm71, 1, 0
  %v74 = vsel %vm72, 1, 0
  %v75 = vcvt.s32.f32 %v73
  %v76 = vcvt.s32.f32 %v74
  %v79 = vlaneseq
  %v80 = vshrl.u32 %v79, 7
  %v81 = vsub.s32 0, %v80
  %v82 = vrot.slane %v75, %v81
  %v83 = vlaneseq
  %v84 = vshrl.u32 %v83, 7
  %v85 = vsub.s32 1, %v84
  %v86 = vrot.slane %v75, %v85
  %v87 = vlaneseq
  %v88 = vshrl.u32 %v87, 7
  %v89 = vsub.s32 2, %v88
  %v90 = vrot.slane %v75, %v89
  %v91 = vlaneseq
  %v92 = vshrl.u32 %v91, 7
  %v93 = vsub.s32 3, %v92
  %v94 = vrot.slane %v75, %v93
  %v95 = vlaneseq
  %v96 = vshrl.u32 %v95, 7
  %v97 = vsub.s32 0, %v96
  %v98 = vrot.slane %v76, %v97
  %v99 = vlaneseq
  %v100 = vshrl.u32 %v99, 7
  %v101 = vsub.s32 1, %v100
  %v102 = vrot.slane %v76, %v101
  %v103 = vlaneseq
  %v104 = vshrl.u32 %v103, 7
  %v105 = vsub.s32 2, %v104
  %v106 = vrot.slane %v76, %v105
  %v107 = vlaneseq
  %v108 = vshrl.u32 %v107, 7
  %v109 = vsub.s32 3, %v108
  %v110 = vrot.slane %v76, %v109
  %v119 = vpack.c.bf16 %v82, %v82
  %v120 = vpack.c.bf16 %v86, %v86
  %v121 = vpack.c.bf16 %v90, %v90
  %v122 = vpack.c.bf16 %v94, %v94
  %v123 = vpack.c.bf16 %v98, %v98
  %v124 = vpack.c.bf16 %v102, %v102
  %v125 = vpack.c.bf16 %v106, %v106
  %v126 = vpack.c.bf16 %v110, %v110
  %v127 = vld [vmem:[%s2] sm:$0xff]
  %v128 = vld [vmem:[%s2 + $0x8] sm:$0xff]
  %v129 = vld [vmem:[%s2 + $0x10] sm:$0xff]
  %v130 = vld [vmem:[%s2 + $0x18] sm:$0xff]
  %v131 = vld [vmem:[%s2 + $0x20] sm:$0xff]
  %v132 = vld [vmem:[%s2 + $0x28] sm:$0xff]
  %v133 = vld [vmem:[%s2 + $0x30] sm:$0xff]
  %v134 = vld [vmem:[%s2 + $0x38] sm:$0xff]
  %v135 = vld [vmem:[%s2 + $0x40] sm:$0xff]
  %v136 = vld [vmem:[%s2 + $0x48] sm:$0xff]
  %v137 = vld [vmem:[%s2 + $0x50] sm:$0xff]
  %v138 = vld [vmem:[%s2 + $0x58] sm:$0xff]
  %v139 = vld [vmem:[%s2 + $0x60] sm:$0xff]
  %v140 = vld [vmem:[%s2 + $0x68] sm:$0xff]
  %v141 = vld [vmem:[%s2 + $0x70] sm:$0xff]
  %v142 = vld [vmem:[%s2 + $0x78] sm:$0xff]
  %v143 = vld [vmem:[%s2 + $0x80] sm:$0xff]
  %v144 = vld [vmem:[%s2 + $0x88] sm:$0xff]
  %v145 = vld [vmem:[%s2 + $0x90] sm:$0xff]
  %v146 = vld [vmem:[%s2 + $0x98] sm:$0xff]
  %v147 = vld [vmem:[%s2 + $0xa0] sm:$0xff]
  %v148 = vld [vmem:[%s2 + $0xa8] sm:$0xff]
  %v149 = vld [vmem:[%s2 + $0xb0] sm:$0xff]
  %v150 = vld [vmem:[%s2 + $0xb8] sm:$0xff]
  %v151 = vld [vmem:[%s2 + $0xc0] sm:$0xff]
  %v152 = vld [vmem:[%s2 + $0xc8] sm:$0xff]
  %v153 = vld [vmem:[%s2 + $0xd0] sm:$0xff]
  %v154 = vld [vmem:[%s2 + $0xd8] sm:$0xff]
  %v155 = vld [vmem:[%s2 + $0xe0] sm:$0xff]
  %v156 = vld [vmem:[%s2 + $0xe8] sm:$0xff]
  %v157 = vld [vmem:[%s2 + $0xf0] sm:$0xff]
  %v158 = vld [vmem:[%s2 + $0xf8] sm:$0xff]
  %v159 = vld [vmem:[%s2 + $0x100] sm:$0xff]
  %v160 = vld [vmem:[%s2 + $0x108] sm:$0xff]
  %v161 = vld [vmem:[%s2 + $0x110] sm:$0xff]
  %v162 = vld [vmem:[%s2 + $0x118] sm:$0xff]
  %v163 = vld [vmem:[%s2 + $0x120] sm:$0xff]
  %v164 = vld [vmem:[%s2 + $0x128] sm:$0xff]
  %v165 = vld [vmem:[%s2 + $0x130] sm:$0xff]
  %v166 = vld [vmem:[%s2 + $0x138] sm:$0xff]
  %v167 = vld [vmem:[%s2 + $0x140] sm:$0xff]
  %v168 = vld [vmem:[%s2 + $0x148] sm:$0xff]
  %v169 = vld [vmem:[%s2 + $0x150] sm:$0xff]
  %v170 = vld [vmem:[%s2 + $0x158] sm:$0xff]
  %v171 = vld [vmem:[%s2 + $0x160] sm:$0xff]
  %v172 = vld [vmem:[%s2 + $0x168] sm:$0xff]
  %v173 = vld [vmem:[%s2 + $0x170] sm:$0xff]
  %v174 = vld [vmem:[%s2 + $0x178] sm:$0xff]
  %v175 = vld [vmem:[%s2 + $0x180] sm:$0xff]
  %v176 = vld [vmem:[%s2 + $0x188] sm:$0xff]
  %v177 = vld [vmem:[%s2 + $0x190] sm:$0xff]
  %v178 = vld [vmem:[%s2 + $0x198] sm:$0xff]
  %v179 = vld [vmem:[%s2 + $0x1a0] sm:$0xff]
  %v180 = vld [vmem:[%s2 + $0x1a8] sm:$0xff]
  %v181 = vld [vmem:[%s2 + $0x1b0] sm:$0xff]
  %v182 = vld [vmem:[%s2 + $0x1b8] sm:$0xff]
  %v183 = vld [vmem:[%s2 + $0x1c0] sm:$0xff]
  %v184 = vld [vmem:[%s2 + $0x1c8] sm:$0xff]
  %v185 = vld [vmem:[%s2 + $0x1d0] sm:$0xff]
  %v186 = vld [vmem:[%s2 + $0x1d8] sm:$0xff]
  %v187 = vld [vmem:[%s2 + $0x1e0] sm:$0xff]
  %v188 = vld [vmem:[%s2 + $0x1e8] sm:$0xff]
  %v189 = vld [vmem:[%s2 + $0x1f0] sm:$0xff]
  %v190 = vld [vmem:[%s2 + $0x1f8] sm:$0xff]
  %v191 = vld [vmem:[%s2 + $0x200] sm:$0xff]
  %v192 = vld [vmem:[%s2 + $0x208] sm:$0xff]
  %v193 = vld [vmem:[%s2 + $0x210] sm:$0xff]
  %v194 = vld [vmem:[%s2 + $0x218] sm:$0xff]
  %v195 = vld [vmem:[%s2 + $0x220] sm:$0xff]
  %v196 = vld [vmem:[%s2 + $0x228] sm:$0xff]
  %v197 = vld [vmem:[%s2 + $0x230] sm:$0xff]
  %v198 = vld [vmem:[%s2 + $0x238] sm:$0xff]
  %v199 = vld [vmem:[%s2 + $0x240] sm:$0xff]
  %v200 = vld [vmem:[%s2 + $0x248] sm:$0xff]
  %v201 = vld [vmem:[%s2 + $0x250] sm:$0xff]
  %v202 = vld [vmem:[%s2 + $0x258] sm:$0xff]
  %v203 = vld [vmem:[%s2 + $0x260] sm:$0xff]
  %v204 = vld [vmem:[%s2 + $0x268] sm:$0xff]
  %v205 = vld [vmem:[%s2 + $0x270] sm:$0xff]
  %v206 = vld [vmem:[%s2 + $0x278] sm:$0xff]
  %v207 = vld [vmem:[%s2 + $0x280] sm:$0xff]
  %v208 = vld [vmem:[%s2 + $0x288] sm:$0xff]
  %v209 = vld [vmem:[%s2 + $0x290] sm:$0xff]
  %v210 = vld [vmem:[%s2 + $0x298] sm:$0xff]
  %v211 = vld [vmem:[%s2 + $0x2a0] sm:$0xff]
  %v212 = vld [vmem:[%s2 + $0x2a8] sm:$0xff]
  %v213 = vld [vmem:[%s2 + $0x2b0] sm:$0xff]
  %v214 = vld [vmem:[%s2 + $0x2b8] sm:$0xff]
  %v215 = vld [vmem:[%s2 + $0x2c0] sm:$0xff]
  %v216 = vld [vmem:[%s2 + $0x2c8] sm:$0xff]
  %v217 = vld [vmem:[%s2 + $0x2d0] sm:$0xff]
  %v218 = vld [vmem:[%s2 + $0x2d8] sm:$0xff]
  %v219 = vld [vmem:[%s2 + $0x2e0] sm:$0xff]
  %v220 = vld [vmem:[%s2 + $0x2e8] sm:$0xff]
  %v221 = vld [vmem:[%s2 + $0x2f0] sm:$0xff]
  %v222 = vld [vmem:[%s2 + $0x2f8] sm:$0xff]
  %v223 = vld [vmem:[%s2 + $0x300] sm:$0xff]
  %v224 = vld [vmem:[%s2 + $0x308] sm:$0xff]
  %v225 = vld [vmem:[%s2 + $0x310] sm:$0xff]
  %v226 = vld [vmem:[%s2 + $0x318] sm:$0xff]
  %v227 = vld [vmem:[%s2 + $0x320] sm:$0xff]
  %v228 = vld [vmem:[%s2 + $0x328] sm:$0xff]
  %v229 = vld [vmem:[%s2 + $0x330] sm:$0xff]
  %v230 = vld [vmem:[%s2 + $0x338] sm:$0xff]
  %v231 = vld [vmem:[%s2 + $0x340] sm:$0xff]
  %v232 = vld [vmem:[%s2 + $0x348] sm:$0xff]
  %v233 = vld [vmem:[%s2 + $0x350] sm:$0xff]
  %v234 = vld [vmem:[%s2 + $0x358] sm:$0xff]
  %v235 = vld [vmem:[%s2 + $0x360] sm:$0xff]
  %v236 = vld [vmem:[%s2 + $0x368] sm:$0xff]
  %v237 = vld [vmem:[%s2 + $0x370] sm:$0xff]
  %v238 = vld [vmem:[%s2 + $0x378] sm:$0xff]
  %v239 = vld [vmem:[%s2 + $0x380] sm:$0xff]
  %v240 = vld [vmem:[%s2 + $0x388] sm:$0xff]
  %v241 = vld [vmem:[%s2 + $0x390] sm:$0xff]
  %v242 = vld [vmem:[%s2 + $0x398] sm:$0xff]
  %v243 = vld [vmem:[%s2 + $0x3a0] sm:$0xff]
  %v244 = vld [vmem:[%s2 + $0x3a8] sm:$0xff]
  %v245 = vld [vmem:[%s2 + $0x3b0] sm:$0xff]
  %v246 = vld [vmem:[%s2 + $0x3b8] sm:$0xff]
  %v247 = vld [vmem:[%s2 + $0x3c0] sm:$0xff]
  %v248 = vld [vmem:[%s2 + $0x3c8] sm:$0xff]
  %v249 = vld [vmem:[%s2 + $0x3d0] sm:$0xff]
  %v250 = vld [vmem:[%s2 + $0x3d8] sm:$0xff]
  %v251 = vld [vmem:[%s2 + $0x3e0] sm:$0xff]
  %v252 = vld [vmem:[%s2 + $0x3e8] sm:$0xff]
  %v253 = vld [vmem:[%s2 + $0x3f0] sm:$0xff]
  %v254 = vld [vmem:[%s2 + $0x3f8] sm:$0xff]
  %v255 = vld [vmem:[%s3] sm:$0xf]
  %v257 = vlaneseq
  %v258 = vshrl.u32 %v257, 7
  %v259 = vsub.s32 0, %v258
  %v260 = vrot.slane %v255, %v259
  %v261 = vlaneseq
  %v262 = vshrl.u32 %v261, 7
  %v263 = vsub.s32 1, %v262
  %v264 = vrot.slane %v255, %v263
  %v265 = vlaneseq
  %v266 = vshrl.u32 %v265, 7
  %v267 = vsub.s32 2, %v266
  %v268 = vrot.slane %v255, %v267
  %v269 = vlaneseq
  %v270 = vshrl.u32 %v269, 7
  %v271 = vsub.s32 3, %v270
  %v272 = vrot.slane %v255, %v271
  %v285 = vunpack.c.l.b16 %v119
  %v286 = vunpack.c.l.b16 %v120
  %v287 = vunpack.c.l.b16 %v121
  %v288 = vunpack.c.l.b16 %v122
  %v289 = vunpack.c.l.b16 %v123
  %v290 = vunpack.c.l.b16 %v124
  %v291 = vunpack.c.l.b16 %v125
  %v292 = vunpack.c.l.b16 %v126
  %v293 = vrot.slane %v289, 7
  %vm294 = vcmask 1041409
  %v295 = vsel %vm294, %v293, %v285
  %v296 = vrot.slane %v290, 7
  %v297 = vsel %vm294, %v296, %v286
  %v298 = vrot.slane %v291, 7
  %v299 = vsel %vm294, %v298, %v287
  %v300 = vrot.slane %v292, 7
  %v301 = vsel %vm294, %v300, %v288
  %v302 = vpack.c.b16 %v295, %v295
  %v303 = vpack.c.b16 %v297, %v297
  %v304 = vpack.c.b16 %v299, %v299
  %v305 = vpack.c.b16 %v301, %v301
  %v438 = vunpack.c.l.b16 %v127
  %v439 = vunpack.c.h.b16 %v127
  %v440 = vunpack.c.l.b16 %v128
  %v441 = vunpack.c.h.b16 %v128
  %v442 = vunpack.c.l.b16 %v129
  %v443 = vunpack.c.h.b16 %v129
  %v444 = vunpack.c.l.b16 %v130
  %v445 = vunpack.c.h.b16 %v130
  %v446 = vunpack.c.l.b16 %v131
  %v447 = vunpack.c.h.b16 %v131
  %v448 = vunpack.c.l.b16 %v132
  %v449 = vunpack.c.h.b16 %v132
  %v450 = vunpack.c.l.b16 %v133
  %v451 = vunpack.c.h.b16 %v133
  %v452 = vunpack.c.l.b16 %v134
  %v453 = vunpack.c.h.b16 %v134
  %v454 = vunpack.c.l.b16 %v135
  %v455 = vunpack.c.h.b16 %v135
  %v456 = vunpack.c.l.b16 %v136
  %v457 = vunpack.c.h.b16 %v136
  %v458 = vunpack.c.l.b16 %v137
  %v459 = vunpack.c.h.b16 %v137
  %v460 = vunpack.c.l.b16 %v138
  %v461 = vunpack.c.h.b16 %v138
  %v462 = vunpack.c.l.b16 %v139
  %v463 = vunpack.c.h.b16 %v139
  %v464 = vunpack.c.l.b16 %v140
  %v465 = vunpack.c.h.b16 %v140
  %v466 = vunpack.c.l.b16 %v141
  %v467 = vunpack.c.h.b16 %v141
  %v468 = vunpack.c.l.b16 %v142
  %v469 = vunpack.c.h.b16 %v142
  %v470 = vunpack.c.l.b16 %v143
  %v471 = vunpack.c.h.b16 %v143
  %v472 = vunpack.c.l.b16 %v144
  %v473 = vunpack.c.h.b16 %v144
  %v474 = vunpack.c.l.b16 %v145
  %v475 = vunpack.c.h.b16 %v145
  %v476 = vunpack.c.l.b16 %v146
  %v477 = vunpack.c.h.b16 %v146
  %v478 = vunpack.c.l.b16 %v147
  %v479 = vunpack.c.h.b16 %v147
  %v480 = vunpack.c.l.b16 %v148
  %v481 = vunpack.c.h.b16 %v148
  %v482 = vunpack.c.l.b16 %v149
  %v483 = vunpack.c.h.b16 %v149
  %v484 = vunpack.c.l.b16 %v150
  %v485 = vunpack.c.h.b16 %v150
  %v486 = vunpack.c.l.b16 %v151
  %v487 = vunpack.c.h.b16 %v151
  %v488 = vunpack.c.l.b16 %v152
  %v489 = vunpack.c.h.b16 %v152
  %v490 = vunpack.c.l.b16 %v153
  %v491 = vunpack.c.h.b16 %v153
  %v492 = vunpack.c.l.b16 %v154
  %v493 = vunpack.c.h.b16 %v154
  %v494 = vunpack.c.l.b16 %v155
  %v495 = vunpack.c.h.b16 %v155
  %v496 = vunpack.c.l.b16 %v156
  %v497 = vunpack.c.h.b16 %v156
  %v498 = vunpack.c.l.b16 %v157
  %v499 = vunpack.c.h.b16 %v157
  %v500 = vunpack.c.l.b16 %v158
  %v501 = vunpack.c.h.b16 %v158
  %v502 = vunpack.c.l.b16 %v159
  %v503 = vunpack.c.h.b16 %v159
  %v504 = vunpack.c.l.b16 %v160
  %v505 = vunpack.c.h.b16 %v160
  %v506 = vunpack.c.l.b16 %v161
  %v507 = vunpack.c.h.b16 %v161
  %v508 = vunpack.c.l.b16 %v162
  %v509 = vunpack.c.h.b16 %v162
  %v510 = vunpack.c.l.b16 %v163
  %v511 = vunpack.c.h.b16 %v163
  %v512 = vunpack.c.l.b16 %v164
  %v513 = vunpack.c.h.b16 %v164
  %v514 = vunpack.c.l.b16 %v165
  %v515 = vunpack.c.h.b16 %v165
  %v516 = vunpack.c.l.b16 %v166
  %v517 = vunpack.c.h.b16 %v166
  %v518 = vunpack.c.l.b16 %v167
  %v519 = vunpack.c.h.b16 %v167
  %v520 = vunpack.c.l.b16 %v168
  %v521 = vunpack.c.h.b16 %v168
  %v522 = vunpack.c.l.b16 %v169
  %v523 = vunpack.c.h.b16 %v169
  %v524 = vunpack.c.l.b16 %v170
  %v525 = vunpack.c.h.b16 %v170
  %v526 = vunpack.c.l.b16 %v171
  %v527 = vunpack.c.h.b16 %v171
  %v528 = vunpack.c.l.b16 %v172
  %v529 = vunpack.c.h.b16 %v172
  %v530 = vunpack.c.l.b16 %v173
  %v531 = vunpack.c.h.b16 %v173
  %v532 = vunpack.c.l.b16 %v174
  %v533 = vunpack.c.h.b16 %v174
  %v534 = vunpack.c.l.b16 %v175
  %v535 = vunpack.c.h.b16 %v175
  %v536 = vunpack.c.l.b16 %v176
  %v537 = vunpack.c.h.b16 %v176
  %v538 = vunpack.c.l.b16 %v177
  %v539 = vunpack.c.h.b16 %v177
  %v540 = vunpack.c.l.b16 %v178
  %v541 = vunpack.c.h.b16 %v178
  %v542 = vunpack.c.l.b16 %v179
  %v543 = vunpack.c.h.b16 %v179
  %v544 = vunpack.c.l.b16 %v180
  %v545 = vunpack.c.h.b16 %v180
  %v546 = vunpack.c.l.b16 %v181
  %v547 = vunpack.c.h.b16 %v181
  %v548 = vunpack.c.l.b16 %v182
  %v549 = vunpack.c.h.b16 %v182
  %v550 = vunpack.c.l.b16 %v183
  %v551 = vunpack.c.h.b16 %v183
  %v552 = vunpack.c.l.b16 %v184
  %v553 = vunpack.c.h.b16 %v184
  %v554 = vunpack.c.l.b16 %v185
  %v555 = vunpack.c.h.b16 %v185
  %v556 = vunpack.c.l.b16 %v186
  %v557 = vunpack.c.h.b16 %v186
  %v558 = vunpack.c.l.b16 %v187
  %v559 = vunpack.c.h.b16 %v187
  %v560 = vunpack.c.l.b16 %v188
  %v561 = vunpack.c.h.b16 %v188
  %v562 = vunpack.c.l.b16 %v189
  %v563 = vunpack.c.h.b16 %v189
  %v564 = vunpack.c.l.b16 %v190
  %v565 = vunpack.c.h.b16 %v190
  %v566 = vunpack.c.l.b16 %v191
  %v567 = vunpack.c.h.b16 %v191
  %v568 = vunpack.c.l.b16 %v192
  %v569 = vunpack.c.h.b16 %v192
  %v570 = vunpack.c.l.b16 %v193
  %v571 = vunpack.c.h.b16 %v193
  %v572 = vunpack.c.l.b16 %v194
  %v573 = vunpack.c.h.b16 %v194
  %v574 = vunpack.c.l.b16 %v195
  %v575 = vunpack.c.h.b16 %v195
  %v576 = vunpack.c.l.b16 %v196
  %v577 = vunpack.c.h.b16 %v196
  %v578 = vunpack.c.l.b16 %v197
  %v579 = vunpack.c.h.b16 %v197
  %v580 = vunpack.c.l.b16 %v198
  %v581 = vunpack.c.h.b16 %v198
  %v582 = vunpack.c.l.b16 %v199
  %v583 = vunpack.c.h.b16 %v199
  %v584 = vunpack.c.l.b16 %v200
  %v585 = vunpack.c.h.b16 %v200
  %v586 = vunpack.c.l.b16 %v201
  %v587 = vunpack.c.h.b16 %v201
  %v588 = vunpack.c.l.b16 %v202
  %v589 = vunpack.c.h.b16 %v202
  %v590 = vunpack.c.l.b16 %v203
  %v591 = vunpack.c.h.b16 %v203
  %v592 = vunpack.c.l.b16 %v204
  %v593 = vunpack.c.h.b16 %v204
  %v594 = vunpack.c.l.b16 %v205
  %v595 = vunpack.c.h.b16 %v205
  %v596 = vunpack.c.l.b16 %v206
  %v597 = vunpack.c.h.b16 %v206
  %v598 = vunpack.c.l.b16 %v207
  %v599 = vunpack.c.h.b16 %v207
  %v600 = vunpack.c.l.b16 %v208
  %v601 = vunpack.c.h.b16 %v208
  %v602 = vunpack.c.l.b16 %v209
  %v603 = vunpack.c.h.b16 %v209
  %v604 = vunpack.c.l.b16 %v210
  %v605 = vunpack.c.h.b16 %v210
  %v606 = vunpack.c.l.b16 %v211
  %v607 = vunpack.c.h.b16 %v211
  %v608 = vunpack.c.l.b16 %v212
  %v609 = vunpack.c.h.b16 %v212
  %v610 = vunpack.c.l.b16 %v213
  %v611 = vunpack.c.h.b16 %v213
  %v612 = vunpack.c.l.b16 %v214
  %v613 = vunpack.c.h.b16 %v214
  %v614 = vunpack.c.l.b16 %v215
  %v615 = vunpack.c.h.b16 %v215
  %v616 = vunpack.c.l.b16 %v216
  %v617 = vunpack.c.h.b16 %v216
  %v618 = vunpack.c.l.b16 %v217
  %v619 = vunpack.c.h.b16 %v217
  %v620 = vunpack.c.l.b16 %v218
  %v621 = vunpack.c.h.b16 %v218
  %v622 = vunpack.c.l.b16 %v219
  %v623 = vunpack.c.h.b16 %v219
  %v624 = vunpack.c.l.b16 %v220
  %v625 = vunpack.c.h.b16 %v220
  %v626 = vunpack.c.l.b16 %v221
  %v627 = vunpack.c.h.b16 %v221
  %v628 = vunpack.c.l.b16 %v222
  %v629 = vunpack.c.h.b16 %v222
  %v630 = vunpack.c.l.b16 %v223
  %v631 = vunpack.c.h.b16 %v223
  %v632 = vunpack.c.l.b16 %v224
  %v633 = vunpack.c.h.b16 %v224
  %v634 = vunpack.c.l.b16 %v225
  %v635 = vunpack.c.h.b16 %v225
  %v636 = vunpack.c.l.b16 %v226
  %v637 = vunpack.c.h.b16 %v226
  %v638 = vunpack.c.l.b16 %v227
  %v639 = vunpack.c.h.b16 %v227
  %v640 = vunpack.c.l.b16 %v228
  %v641 = vunpack.c.h.b16 %v228
  %v642 = vunpack.c.l.b16 %v229
  %v643 = vunpack.c.h.b16 %v229
  %v644 = vunpack.c.l.b16 %v230
  %v645 = vunpack.c.h.b16 %v230
  %v646 = vunpack.c.l.b16 %v231
  %v647 = vunpack.c.h.b16 %v231
  %v648 = vunpack.c.l.b16 %v232
  %v649 = vunpack.c.h.b16 %v232
  %v650 = vunpack.c.l.b16 %v233
  %v651 = vunpack.c.h.b16 %v233
  %v652 = vunpack.c.l.b16 %v234
  %v653 = vunpack.c.h.b16 %v234
  %v654 = vunpack.c.l.b16 %v235
  %v655 = vunpack.c.h.b16 %v235
  %v656 = vunpack.c.l.b16 %v236
  %v657 = vunpack.c.h.b16 %v236
  %v658 = vunpack.c.l.b16 %v237
  %v659 = vunpack.c.h.b16 %v237
  %v660 = vunpack.c.l.b16 %v238
  %v661 = vunpack.c.h.b16 %v238
  %v662 = vunpack.c.l.b16 %v239
  %v663 = vunpack.c.h.b16 %v239
  %v664 = vunpack.c.l.b16 %v240
  %v665 = vunpack.c.h.b16 %v240
  %v666 = vunpack.c.l.b16 %v241
  %v667 = vunpack.c.h.b16 %v241
  %v668 = vunpack.c.l.b16 %v242
  %v669 = vunpack.c.h.b16 %v242
  %v670 = vunpack.c.l.b16 %v243
  %v671 = vunpack.c.h.b16 %v243
  %v672 = vunpack.c.l.b16 %v244
  %v673 = vunpack.c.h.b16 %v244
  %v674 = vunpack.c.l.b16 %v245
  %v675 = vunpack.c.h.b16 %v245
  %v676 = vunpack.c.l.b16 %v246
  %v677 = vunpack.c.h.b16 %v246
  %v678 = vunpack.c.l.b16 %v247
  %v679 = vunpack.c.h.b16 %v247
  %v680 = vunpack.c.l.b16 %v248
  %v681 = vunpack.c.h.b16 %v248
  %v682 = vunpack.c.l.b16 %v249
  %v683 = vunpack.c.h.b16 %v249
  %v684 = vunpack.c.l.b16 %v250
  %v685 = vunpack.c.h.b16 %v250
  %v686 = vunpack.c.l.b16 %v251
  %v687 = vunpack.c.h.b16 %v251
  %v688 = vunpack.c.l.b16 %v252
  %v689 = vunpack.c.h.b16 %v252
  %v690 = vunpack.c.l.b16 %v253
  %v691 = vunpack.c.h.b16 %v253
  %v692 = vunpack.c.l.b16 %v254
  %v693 = vunpack.c.h.b16 %v254
  %v694 = vpack.c.b16 %v442, %v438
  %v695 = vpack.c.b16 %v443, %v439
  %v696 = vpack.c.b16 %v444, %v440
  %v697 = vpack.c.b16 %v445, %v441
  %v698 = vpack.c.b16 %v450, %v446
  %v699 = vpack.c.b16 %v451, %v447
  %v700 = vpack.c.b16 %v452, %v448
  %v701 = vpack.c.b16 %v453, %v449
  %v702 = vpack.c.b16 %v458, %v454
  %v703 = vpack.c.b16 %v459, %v455
  %v704 = vpack.c.b16 %v460, %v456
  %v705 = vpack.c.b16 %v461, %v457
  %v706 = vpack.c.b16 %v466, %v462
  %v707 = vpack.c.b16 %v467, %v463
  %v708 = vpack.c.b16 %v468, %v464
  %v709 = vpack.c.b16 %v469, %v465
  %v710 = vpack.c.b16 %v474, %v470
  %v711 = vpack.c.b16 %v475, %v471
  %v712 = vpack.c.b16 %v476, %v472
  %v713 = vpack.c.b16 %v477, %v473
  %v714 = vpack.c.b16 %v482, %v478
  %v715 = vpack.c.b16 %v483, %v479
  %v716 = vpack.c.b16 %v484, %v480
  %v717 = vpack.c.b16 %v485, %v481
  %v718 = vpack.c.b16 %v490, %v486
  %v719 = vpack.c.b16 %v491, %v487
  %v720 = vpack.c.b16 %v492, %v488
  %v721 = vpack.c.b16 %v493, %v489
  %v722 = vpack.c.b16 %v498, %v494
  %v723 = vpack.c.b16 %v499, %v495
  %v724 = vpack.c.b16 %v500, %v496
  %v725 = vpack.c.b16 %v501, %v497
  %v726 = vpack.c.b16 %v506, %v502
  %v727 = vpack.c.b16 %v507, %v503
  %v728 = vpack.c.b16 %v508, %v504
  %v729 = vpack.c.b16 %v509, %v505
  %v730 = vpack.c.b16 %v514, %v510
  %v731 = vpack.c.b16 %v515, %v511
  %v732 = vpack.c.b16 %v516, %v512
  %v733 = vpack.c.b16 %v517, %v513
  %v734 = vpack.c.b16 %v522, %v518
  %v735 = vpack.c.b16 %v523, %v519
  %v736 = vpack.c.b16 %v524, %v520
  %v737 = vpack.c.b16 %v525, %v521
  %v738 = vpack.c.b16 %v530, %v526
  %v739 = vpack.c.b16 %v531, %v527
  %v740 = vpack.c.b16 %v532, %v528
  %v741 = vpack.c.b16 %v533, %v529
  %v742 = vpack.c.b16 %v538, %v534
  %v743 = vpack.c.b16 %v539, %v535
  %v744 = vpack.c.b16 %v540, %v536
  %v745 = vpack.c.b16 %v541, %v537
  %v746 = vpack.c.b16 %v546, %v542
  %v747 = vpack.c.b16 %v547, %v543
  %v748 = vpack.c.b16 %v548, %v544
  %v749 = vpack.c.b16 %v549, %v545
  %v750 = vpack.c.b16 %v554, %v550
  %v751 = vpack.c.b16 %v555, %v551
  %v752 = vpack.c.b16 %v556, %v552
  %v753 = vpack.c.b16 %v557, %v553
  %v754 = vpack.c.b16 %v562, %v558
  %v755 = vpack.c.b16 %v563, %v559
  %v756 = vpack.c.b16 %v564, %v560
  %v757 = vpack.c.b16 %v565, %v561
  %v758 = vpack.c.b16 %v570, %v566
  %v759 = vpack.c.b16 %v571, %v567
  %v760 = vpack.c.b16 %v572, %v568
  %v761 = vpack.c.b16 %v573, %v569
  %v762 = vpack.c.b16 %v578, %v574
  %v763 = vpack.c.b16 %v579, %v575
  %v764 = vpack.c.b16 %v580, %v576
  %v765 = vpack.c.b16 %v581, %v577
  %v766 = vpack.c.b16 %v586, %v582
  %v767 = vpack.c.b16 %v587, %v583
  %v768 = vpack.c.b16 %v588, %v584
  %v769 = vpack.c.b16 %v589, %v585
  %v770 = vpack.c.b16 %v594, %v590
  %v771 = vpack.c.b16 %v595, %v591
  %v772 = vpack.c.b16 %v596, %v592
  %v773 = vpack.c.b16 %v597, %v593
  %v774 = vpack.c.b16 %v602, %v598
  %v775 = vpack.c.b16 %v603, %v599
  %v776 = vpack.c.b16 %v604, %v600
  %v777 = vpack.c.b16 %v605, %v601
  %v778 = vpack.c.b16 %v610, %v606
  %v779 = vpack.c.b16 %v611, %v607
  %v780 = vpack.c.b16 %v612, %v608
  %v781 = vpack.c.b16 %v613, %v609
  %v782 = vpack.c.b16 %v618, %v614
  %v783 = vpack.c.b16 %v619, %v615
  %v784 = vpack.c.b16 %v620, %v616
  %v785 = vpack.c.b16 %v621, %v617
  %v786 = vpack.c.b16 %v626, %v622
  %v787 = vpack.c.b16 %v627, %v623
  %v788 = vpack.c.b16 %v628, %v624
  %v789 = vpack.c.b16 %v629, %v625
  %v790 = vpack.c.b16 %v634, %v630
  %v791 = vpack.c.b16 %v635, %v631
  %v792 = vpack.c.b16 %v636, %v632
  %v793 = vpack.c.b16 %v637, %v633
  %v794 = vpack.c.b16 %v642, %v638
  %v795 = vpack.c.b16 %v643, %v639
  %v796 = vpack.c.b16 %v644, %v640
  %v797 = vpack.c.b16 %v645, %v641
  %v798 = vpack.c.b16 %v650, %v646
  %v799 = vpack.c.b16 %v651, %v647
  %v800 = vpack.c.b16 %v652, %v648
  %v801 = vpack.c.b16 %v653, %v649
  %v802 = vpack.c.b16 %v658, %v654
  %v803 = vpack.c.b16 %v659, %v655
  %v804 = vpack.c.b16 %v660, %v656
  %v805 = vpack.c.b16 %v661, %v657
  %v806 = vpack.c.b16 %v666, %v662
  %v807 = vpack.c.b16 %v667, %v663
  %v808 = vpack.c.b16 %v668, %v664
  %v809 = vpack.c.b16 %v669, %v665
  %v810 = vpack.c.b16 %v674, %v670
  %v811 = vpack.c.b16 %v675, %v671
  %v812 = vpack.c.b16 %v676, %v672
  %v813 = vpack.c.b16 %v677, %v673
  %v814 = vpack.c.b16 %v682, %v678
  %v815 = vpack.c.b16 %v683, %v679
  %v816 = vpack.c.b16 %v684, %v680
  %v817 = vpack.c.b16 %v685, %v681
  %v818 = vpack.c.b16 %v690, %v686
  %v819 = vpack.c.b16 %v691, %v687
  %v820 = vpack.c.b16 %v692, %v688
  %v821 = vpack.c.b16 %v693, %v689
  %950 = vmatprep.subr.bf16.mxu0 %v695
  %951 = vmatpush1.bf16.msra.mxu0 %v694
  %952 = vmatprep.subr.bf16.mxu0 %v699
  %953 = vmatpush1.bf16.msra.mxu0 %v698
  %954 = vmatprep.subr.bf16.mxu0 %v703
  %955 = vmatpush1.bf16.msra.mxu0 %v702
  %956 = vmatprep.subr.bf16.mxu0 %v707
  %957 = vmatpush1.bf16.msra.mxu0 %v706
  %958 = vmatprep.subr.bf16.mxu0 %v711
  %959 = vmatpush1.bf16.msra.mxu0 %v710
  %960 = vmatprep.subr.bf16.mxu0 %v715
  %961 = vmatpush1.bf16.msra.mxu0 %v714
  %962 = vmatprep.subr.bf16.mxu0 %v719
  %963 = vmatpush1.bf16.msra.mxu0 %v718
  %964 = vmatprep.subr.bf16.mxu0 %v723
  %965 = vmatpush1.bf16.msra.mxu0 %v722
  %966 = vmatprep.subr.bf16.mxu0 %v727
  %967 = vmatpush1.bf16.msra.mxu0 %v726
  %968 = vmatprep.subr.bf16.mxu0 %v731
  %969 = vmatpush1.bf16.msra.mxu0 %v730
  %970 = vmatprep.subr.bf16.mxu0 %v735
  %971 = vmatpush1.bf16.msra.mxu0 %v734
  %972 = vmatprep.subr.bf16.mxu0 %v739
  %973 = vmatpush1.bf16.msra.mxu0 %v738
  %974 = vmatprep.subr.bf16.mxu0 %v743
  %975 = vmatpush1.bf16.msra.mxu0 %v742
  %976 = vmatprep.subr.bf16.mxu0 %v747
  %977 = vmatpush1.bf16.msra.mxu0 %v746
  %978 = vmatprep.subr.bf16.mxu0 %v751
  %979 = vmatpush1.bf16.msra.mxu0 %v750
  %980 = vmatprep.subr.bf16.mxu0 %v755
  %981 = vmatpush1.bf16.msra.mxu0 %v754
  %982 = vmatprep.mubr.bf16.mxu0 %v303
  %983 = vmatmul.mubr.bf16.gmra.mrb[0].mxu0 %v302
  %v984 = vpop.f32.mrb[0].mxu0
  %v985 = vadd.f32 %v260, %v984
  %v986 = vpop.f32.mrb[0].mxu0
  %v987 = vadd.f32 %v264, %v986
  %v988 = vpop.f32.mrb[0].mxu0
  %v989 = vpop.f32.mrb[0].mxu0
  %990 = vdwg.mxu0
  %991 = vmatprep.subr.bf16.mxu0 %v759
  %992 = vmatpush1.bf16.msra.mxu0 %v758
  %993 = vmatprep.subr.bf16.mxu0 %v763
  %994 = vmatpush1.bf16.msra.mxu0 %v762
  %995 = vmatprep.subr.bf16.mxu0 %v767
  %996 = vmatpush1.bf16.msra.mxu0 %v766
  %997 = vmatprep.subr.bf16.mxu0 %v771
  %998 = vmatpush1.bf16.msra.mxu0 %v770
  %999 = vmatprep.subr.bf16.mxu0 %v775
  %1000 = vmatpush1.bf16.msra.mxu0 %v774
  %1001 = vmatprep.subr.bf16.mxu0 %v779
  %1002 = vmatpush1.bf16.msra.mxu0 %v778
  %1003 = vmatprep.subr.bf16.mxu0 %v783
  %1004 = vmatpush1.bf16.msra.mxu0 %v782
  %1005 = vmatprep.subr.bf16.mxu0 %v787
  %1006 = vmatpush1.bf16.msra.mxu0 %v786
  %1007 = vmatprep.subr.bf16.mxu0 %v791
  %1008 = vmatpush1.bf16.msra.mxu0 %v790
  %1009 = vmatprep.subr.bf16.mxu0 %v795
  %1010 = vmatpush1.bf16.msra.mxu0 %v794
  %1011 = vmatprep.subr.bf16.mxu0 %v799
  %1012 = vmatpush1.bf16.msra.mxu0 %v798
  %1013 = vmatprep.subr.bf16.mxu0 %v803
  %1014 = vmatpush1.bf16.msra.mxu0 %v802
  %1015 = vmatprep.subr.bf16.mxu0 %v807
  %1016 = vmatpush1.bf16.msra.mxu0 %v806
  %1017 = vmatprep.subr.bf16.mxu0 %v811
  %1018 = vmatpush1.bf16.msra.mxu0 %v810
  %1019 = vmatprep.subr.bf16.mxu0 %v815
  %1020 = vmatpush1.bf16.msra.mxu0 %v814
  %1021 = vmatprep.subr.bf16.mxu0 %v819
  %1022 = vmatpush1.bf16.msra.mxu0 %v818
  %1023 = vmatprep.mubr.bf16.mxu0 %v305
  %1024 = vmatmul.mubr.bf16.gmra.mrb[0].mxu0 %v304
  %v1025 = vpop.f32.mrb[0].mxu0
  %v1026 = vadd.f32 %v985, %v1025
  %v1027 = vpop.f32.mrb[0].mxu0
  %v1028 = vadd.f32 %v987, %v1027
  %v1029 = vpop.f32.mrb[0].mxu0
  %v1030 = vpop.f32.mrb[0].mxu0
  %1031 = vdwg.mxu0
  %1032 = vmatprep.subr.bf16.mxu0 %v697
  %1033 = vmatpush1.bf16.msra.mxu0 %v696
  %1034 = vmatprep.subr.bf16.mxu0 %v701
  %1035 = vmatpush1.bf16.msra.mxu0 %v700
  %1036 = vmatprep.subr.bf16.mxu0 %v705
  %1037 = vmatpush1.bf16.msra.mxu0 %v704
  %1038 = vmatprep.subr.bf16.mxu0 %v709
  %1039 = vmatpush1.bf16.msra.mxu0 %v708
  %1040 = vmatprep.subr.bf16.mxu0 %v713
  %1041 = vmatpush1.bf16.msra.mxu0 %v712
  %1042 = vmatprep.subr.bf16.mxu0 %v717
  %1043 = vmatpush1.bf16.msra.mxu0 %v716
  %1044 = vmatprep.subr.bf16.mxu0 %v721
  %1045 = vmatpush1.bf16.msra.mxu0 %v720
  %1046 = vmatprep.subr.bf16.mxu0 %v725
  %1047 = vmatpush1.bf16.msra.mxu0 %v724
  %1048 = vmatprep.subr.bf16.mxu0 %v729
  %1049 = vmatpush1.bf16.msra.mxu0 %v728
  %1050 = vmatprep.subr.bf16.mxu0 %v733
  %1051 = vmatpush1.bf16.msra.mxu0 %v732
  %1052 = vmatprep.subr.bf16.mxu0 %v737
  %1053 = vmatpush1.bf16.msra.mxu0 %v736
  %1054 = vmatprep.subr.bf16.mxu0 %v741
  %1055 = vmatpush1.bf16.msra.mxu0 %v740
  %1056 = vmatprep.subr.bf16.mxu0 %v745
  %1057 = vmatpush1.bf16.msra.mxu0 %v744
  %1058 = vmatprep.subr.bf16.mxu0 %v749
  %1059 = vmatpush1.bf16.msra.mxu0 %v748
  %1060 = vmatprep.subr.bf16.mxu0 %v753
  %1061 = vmatpush1.bf16.msra.mxu0 %v752
  %1062 = vmatprep.subr.bf16.mxu0 %v757
  %1063 = vmatpush1.bf16.msra.mxu0 %v756
  %1064 = vmatprep.mubr.bf16.mxu0 %v303
  %1065 = vmatmul.mubr.bf16.gmra.mrb[0].mxu0 %v302
  %v1066 = vpop.f32.mrb[0].mxu0
  %v1067 = vadd.f32 %v268, %v1066
  %v1068 = vpop.f32.mrb[0].mxu0
  %v1069 = vadd.f32 %v272, %v1068
  %v1070 = vpop.f32.mrb[0].mxu0
  %v1071 = vpop.f32.mrb[0].mxu0
  %1072 = vdwg.mxu0
  %1073 = vmatprep.subr.bf16.mxu0 %v761
  %1074 = vmatpush1.bf16.msra.mxu0 %v760
  %1075 = vmatprep.subr.bf16.mxu0 %v765
  %1076 = vmatpush1.bf16.msra.mxu0 %v764
  %1077 = vmatprep.subr.bf16.mxu0 %v769
  %1078 = vmatpush1.bf16.msra.mxu0 %v768
  %1079 = vmatprep.subr.bf16.mxu0 %v773
  %1080 = vmatpush1.bf16.msra.mxu0 %v772
  %1081 = vmatprep.subr.bf16.mxu0 %v777
  %1082 = vmatpush1.bf16.msra.mxu0 %v776
  %1083 = vmatprep.subr.bf16.mxu0 %v781
  %1084 = vmatpush1.bf16.msra.mxu0 %v780
  %1085 = vmatprep.subr.bf16.mxu0 %v785
  %1086 = vmatpush1.bf16.msra.mxu0 %v784
  %1087 = vmatprep.subr.bf16.mxu0 %v789
  %1088 = vmatpush1.bf16.msra.mxu0 %v788
  %1089 = vmatprep.subr.bf16.mxu0 %v793
  %1090 = vmatpush1.bf16.msra.mxu0 %v792
  %1091 = vmatprep.subr.bf16.mxu0 %v797
  %1092 = vmatpush1.bf16.msra.mxu0 %v796
  %1093 = vmatprep.subr.bf16.mxu0 %v801
  %1094 = vmatpush1.bf16.msra.mxu0 %v800
  %1095 = vmatprep.subr.bf16.mxu0 %v805
  %1096 = vmatpush1.bf16.msra.mxu0 %v804
  %1097 = vmatprep.subr.bf16.mxu0 %v809
  %1098 = vmatpush1.bf16.msra.mxu0 %v808
  %1099 = vmatprep.subr.bf16.mxu0 %v813
  %1100 = vmatpush1.bf16.msra.mxu0 %v812
  %1101 = vmatprep.subr.bf16.mxu0 %v817
  %1102 = vmatpush1.bf16.msra.mxu0 %v816
  %1103 = vmatprep.subr.bf16.mxu0 %v821
  %1104 = vmatpush1.bf16.msra.mxu0 %v820
  %1105 = vmatprep.mubr.bf16.mxu0 %v305
  %1106 = vmatmul.mubr.bf16.gmra.mrb[0].mxu0 %v304
  %v1107 = vpop.f32.mrb[0].mxu0
  %v1108 = vadd.f32 %v1067, %v1107
  %v1109 = vpop.f32.mrb[0].mxu0
  %v1110 = vadd.f32 %v1069, %v1109
  %v1111 = vpop.f32.mrb[0].mxu0
  %v1112 = vpop.f32.mrb[0].mxu0
  %1113 = vdwg.mxu0
  %v1114 = vld [vmem:[%s4] sm:$0x3]
  %v1115 = vld [vmem:[%s4 + $0x2] sm:$0x3]
  %v1116 = vlaneseq
  %vm1117 = vcmp.ge.s32.totalorder %v1116, 0
  %vm1118 = vcmp.lt.s32.totalorder %v1116, 256
  %vm1119 = vmand %vm1117, %vm1118
  %1120 = vst.msk [vmem:[%s5] sm:$0x3] %vm1119, %v1114
  %1121 = vst.msk [vmem:[%s5 + $0x6] sm:$0x3] %vm1119, %v1115
  %v1126 = vcombine.low %v1026, %v1028
  %v1127 = vcombine.low %v1108, %v1110
  %v1129 = vunpack.c.l.s4 1966171168
  %v1130 = vunpack.c.0.s8 %v1129
  %v1131 = vlaneseq
  %v1132 = vshrl.u32 %v1131, 7
  %v1133 = vsub.s32 %v1130, %v1132
  %v1134 = vrot.slane %v1126, %v1133
  %v1136 = vunpack.c.l.s4 1966171168
  %v1137 = vunpack.c.0.s8 %v1136
  %v1138 = vlaneseq
  %v1139 = vshrl.u32 %v1138, 7
  %v1140 = vsub.s32 %v1137, %v1139
  %v1141 = vrot.slane %v1127, %v1140
  %v1142 = vcombine.low %v1134, %v1141
  %v1143 = vcombine.high %v1134, %v1141
  %v1145 = vunpack.c.l.s4 1966171168
  %v1146 = vunpack.c.0.s8 %v1145
  %v1147 = vlaneseq
  %v1148 = vshrl.u32 %v1147, 7
  %v1149 = vsub.s32 %v1146, %v1148
  %v1150 = vrot.slane %v1142, %v1149
  %v1152 = vunpack.c.l.s4 1966171168
  %v1153 = vunpack.c.0.s8 %v1152
  %v1154 = vlaneseq
  %v1155 = vshrl.u32 %v1154, 7
  %v1156 = vsub.s32 %v1153, %v1155
  %v1157 = vrot.slane %v1143, %v1156
  %vm1160 = vcmp.lt.s32.totalorder %v1116, 512
  %vm1161 = vmand %vm1117, %vm1160
  %1162 = vst.msk [vmem:[%s5 + $0x2] sm:$0xf] %vm1161, %v1150
  %1163 = vst.msk [vmem:[%s5 + $0x8] sm:$0xf] %vm1161, %v1157
  // Predicated region
  $region22: #{sdit_alignment_forward.1} parent=0 // pred_check
    _
  $region23: #{sdit_alignment_forward.1} parent=0 // pred_check_branch
    %1165 = sbr.rel (0) target = $region25
  $region24: #{sdit_alignment_forward.1} parent=0 // pred_region
    _
  $region25: #{sdit_alignment_forward.1} parent=0 // pred_fallthru
    _
  // Predicated region
  $region26: #{sdit_alignment_forward.1} parent=0 // pred_check
    _
  $region27: #{sdit_alignment_forward.1} parent=0 // pred_check_branch
    %1167 = sbr.rel (0) target = $region29
  $region28: #{sdit_alignment_forward.1} parent=0 // pred_region
    _
  $region29: #{sdit_alignment_forward.1} parent=0 // pred_fallthru
    _

</llo_original>
